<compile_context>
chip_gen: v5e
topology: v5e:2x2
jax: 0.10.0
libtpu: 0.0.40
codegen_flags: <defaults>
</compile_context>

<pallas_src>
import functools

import jax
import jax.numpy as jnp
from jax.experimental import pallas as pl
from jax.experimental.pallas import tpu as pltpu

_EPS = 1e-5


# ---------------------------------------------------------------------------
# Kernels.
# NOTE: all math is strictly per-token, so garbage rows/columns from a partial
# last block only feed their own (masked-out) outputs.  If any cross-token
# reduction or accumulator is ever added, that argument breaks -- guard it.
# ---------------------------------------------------------------------------
def _bf_ln_lane_dense_kernel(x_ref, w_ref, o_ref):
    # x_ref: (C, TILE_T) -- channels on sublanes, tokens on lanes.
    # w_ref: (C, 1); o_ref: (C, TILE_T).
    x = x_ref[...].astype(jnp.float32)
    mean = jnp.mean(x, axis=0, keepdims=True)           # (1, TILE_T)
    xc = x - mean
    var = jnp.mean(xc * xc, axis=0, keepdims=True)      # biased (unbiased=False)
    inv = jax.lax.rsqrt(var + _EPS)                     # EUP: one rsqrt per token
    # BiasFree: scale x itself; the mean is only used for the variance.
    y = x * inv * w_ref[...].astype(jnp.float32)
    o_ref[...] = y.astype(o_ref.dtype)


def _bf_ln_channels_last_kernel(x_ref, w_ref, o_ref):
    # x_ref: (TILE_N, C) -- tokens on sublanes, channels on lanes.
    # w_ref: (1, C); o_ref: (TILE_N, C).
    x = x_ref[...].astype(jnp.float32)
    mean = jnp.mean(x, axis=-1, keepdims=True)
    xc = x - mean
    var = jnp.mean(xc * xc, axis=-1, keepdims=True)     # biased (unbiased=False)
    inv = jax.lax.rsqrt(var + _EPS)                     # EUP
    y = x * inv * w_ref[...].astype(jnp.float32)
    o_ref[...] = y.astype(o_ref.dtype)


# ---------------------------------------------------------------------------
# Generation-aware sizing.
# ---------------------------------------------------------------------------
@functools.lru_cache(maxsize=None)
def _hw_params():
    """Returns (vmem_limit_bytes, tile_budget_bytes, target_block_bytes)."""
    try:
        vmem_phys = int(pltpu.get_tpu_info().vmem_capacity_bytes)
    except Exception:
        # Unknown chip / API drift: fall back to v7x-safe (64 MiB VMEM) values.
        vmem_phys = 64 << 20
    if vmem_phys >= (128 << 20):        # v5e / v6e: 128 MiB physical VMEM.
        return 64 << 20, 48 << 20, 4 << 20
    else:                               # v7x: 64 MiB per TensorCore.
        return 40 << 20, 28 << 20, 4 << 20


def _choose_tile(total, c, itemsize, *, align, budget_bytes, target_block_bytes):
    """Largest `align`-multiple token tile whose VMEM working set
    (double-buffered in+out blocks in the input dtype plus ~5 fp32 full-tile
    temporaries) fits `budget_bytes`, targeting ~`target_block_bytes` per
    input block (amortizes the fixed per-grid-step overhead)."""
    per_token = 4 * c * itemsize + 5 * c * 4
    by_budget = max(align, (budget_bytes // per_token) // align * align)
    by_target = max(align, (target_block_bytes // (c * itemsize)) // align * align)
    tile = min(by_budget, by_target)
    tile = min(tile, pl.cdiv(total, align) * align)     # never taller than data
    return max(align, tile)


# ---------------------------------------------------------------------------
# Wrappers.
# ---------------------------------------------------------------------------
@functools.partial(jax.jit, static_argnames=("tile_t",))
def bias_free_layernorm_nchw(x, weight, *, tile_t=None):
    """Restormer-fused path: x is (B, C, H, W); normalizes over C; returns
    (B, C, H, W).  Lane-dense (tokens on lanes) -> full-lane stores and no
    to_3d / to_4d transposes in the surrounding graph."""
    b, c, h, w = x.shape
    hw = h * w
    x3 = x.reshape(b, c, hw)                            # free: contiguous merge
    itemsize = jnp.dtype(x.dtype).itemsize
    vmem_limit, budget, target = _hw_params()
    if tile_t is None:
        tile_t = _choose_tile(hw, c, itemsize, align=128,
                              budget_bytes=budget, target_block_bytes=target)
    w2 = weight.reshape(c, 1)

    n_tok = b * hw
    cost = pl.CostEstimate(
        flops=7 * n_tok * c,
        transcendentals=n_tok,
        bytes_accessed=2 * n_tok * c * itemsize
        + c * jnp.dtype(weight.dtype).itemsize,
    )

    out = pl.pallas_call(
        _bf_ln_lane_dense_kernel,
        out_shape=jax.ShapeDtypeStruct((b, c, hw), x.dtype),
        grid_spec=pltpu.PrefetchScalarGridSpec(
            num_scalar_prefetch=0,
            grid=(b, pl.cdiv(hw, tile_t)),
            in_specs=[
                pl.BlockSpec((None, c, tile_t), lambda bi, ti: (bi, 0, ti)),
                pl.BlockSpec((c, 1), lambda bi, ti: (0, 0)),
            ],
            out_specs=pl.BlockSpec((None, c, tile_t), lambda bi, ti: (bi, 0, ti)),
        ),
        compiler_params=pltpu.CompilerParams(
            dimension_semantics=("parallel", "parallel"),
            vmem_limit_bytes=vmem_limit,
        ),
        cost_estimate=cost,
    )(x3, w2)

    return out.reshape(b, c, h, w)


@functools.partial(jax.jit, static_argnames=("tile_n",))
def bias_free_layernorm(x, weight, *, tile_n=None):
    """Module-equivalent path: x is (..., C); normalizes over the last dim.
    Keeps the channels-last layout (already lane-dense when C % 128 == 0,
    e.g. Restormer's C=384 level).  For C=48/96 levels prefer
    bias_free_layernorm_nchw(), which is lane-dense and skips to_3d."""
    orig_shape = x.shape
    c = orig_shape[-1]
    x2 = x.reshape(-1, c)
    n = x2.shape[0]
    itemsize = jnp.dtype(x.dtype).itemsize
    vmem_limit, budget, target = _hw_params()
    if tile_n is None:
        tile_n = _choose_tile(n, c, itemsize, align=8,
                              budget_bytes=budget, target_block_bytes=target)
    w2 = weight.reshape(1, c)

    cost = pl.CostEstimate(
        flops=7 * n * c,
        transcendentals=n,
        bytes_accessed=2 * n * c * itemsize
        + c * jnp.dtype(weight.dtype).itemsize,
    )

    out = pl.pallas_call(
        _bf_ln_channels_last_kernel,
        out_shape=jax.ShapeDtypeStruct((n, c), x.dtype),
        grid_spec=pltpu.PrefetchScalarGridSpec(
            num_scalar_prefetch=0,
            grid=(pl.cdiv(n, tile_n),),
            in_specs=[
                pl.BlockSpec((tile_n, c), lambda i: (i, 0)),
                pl.BlockSpec((1, c), lambda i: (0, 0)),
            ],
            out_specs=pl.BlockSpec((tile_n, c), lambda i: (i, 0)),
        ),
        compiler_params=pltpu.CompilerParams(
            dimension_semantics=("parallel",),
            vmem_limit_bytes=vmem_limit,
        ),
        cost_estimate=cost,
    )(x2, w2)

    return out.reshape(orig_shape)


# ---------------------------------------------------------------------------
# Reference + demo.
# ---------------------------------------------------------------------------
def _reference_tokens(x_tokens, weight):
    x32 = x_tokens.astype(jnp.float32)
    var = jnp.var(x32, axis=-1, keepdims=True)          # biased, unbiased=False
    return (x32 / jnp.sqrt(var + _EPS)
            * weight.astype(jnp.float32)).astype(x_tokens.dtype)


if __name__ == "__main__":
    key = jax.random.PRNGKey(0)

    # PyTorch-style NCHW conv activation, as fed to Restormer's LayerNorm.
    B, C, H, W = 2, 4, 16, 16
    x_nchw = jax.random.normal(key, (B, C, H, W), dtype=jnp.float32)

    # Deterministic parameter init: nn.Parameter(torch.ones(normalized_shape)).
    weight = jnp.ones((C,), dtype=jnp.float32)

    # Lane-dense fused path: consumes NCHW directly (no to_3d transpose).
    out_nchw = jax.block_until_ready(bias_free_layernorm_nchw(x_nchw, weight))

    # Module-equivalent path: (B, H*W, C), normalization over the last dim.
    x_tokens = jnp.transpose(x_nchw, (0, 2, 3, 1)).reshape(B, H * W, C)  # to_3d
    out_tokens = jax.block_until_ready(bias_free_layernorm(x_tokens, weight))

    ref_tokens = _reference_tokens(x_tokens, weight)
    ref_nchw = jnp.transpose(ref_tokens.reshape(B, H, W, C), (0, 3, 1, 2))  # to_4d

    assert out_nchw.shape == x_nchw.shape
    assert out_tokens.shape == x_tokens.shape
    assert jnp.allclose(out_nchw, ref_nchw, atol=1e-5, rtol=1e-5), (
        f"nchw max err {jnp.max(jnp.abs(out_nchw - ref_nchw))}")
    assert jnp.allclose(out_tokens, ref_tokens, atol=1e-5, rtol=1e-5), (
        f"tokens max err {jnp.max(jnp.abs(out_tokens - ref_tokens))}")

    print("KERNEL_OK")
</pallas_src>

<mosaic_0001>
module attributes {stable_mosaic.version = 11 : i64} {
  func.func @_bf_ln_lane_dense_kernel(%arg0: i32, %arg1: i32, %arg2: memref<1x4x256xf32, #tpu.memory_space<vmem>>, %arg3: memref<4x1xf32, #tpu.memory_space<vmem>>, %arg4: memref<1x4x256xf32, #tpu.memory_space<vmem>>) attributes {dimension_semantics = [#tpu.dimension_semantics<parallel>, #tpu.dimension_semantics<parallel>], iteration_bounds = array<i64: 2, 1>, scalar_prefetch = 0 : i64, scratch_operands = 0 : i64, tpu.core_type = #tpu.core_type<tc>, window_params = [{transform_indices = @transform_0, window_bounds = array<i64: 1, 4, 256>}, {pipeline_mode = #tpu.pipeline_mode<synchronous>, transform_indices = @transform_1, window_bounds = array<i64: 4, 1>}, {transform_indices = @transform_2, window_bounds = array<i64: 1, 4, 256>}]} {
    %c0 = arith.constant 0 : index
    %c0_0 = arith.constant 0 : index
    %c0_1 = arith.constant 0 : index
    %0 = vector.load %arg2[%c0, %c0_0, %c0_1] : memref<1x4x256xf32, #tpu.memory_space<vmem>>, vector<1x4x256xf32>
    %1 = vector.shape_cast %0 : vector<1x4x256xf32> to vector<4x256xf32>
    %cst = arith.constant dense<0.000000e+00> : vector<256xf32>
    %2 = vector.multi_reduction <add>, %1, %cst [0] : vector<4x256xf32> to vector<256xf32>
    %3 = vector.shape_cast %2 : vector<256xf32> to vector<1x256xf32>
    %cst_2 = arith.constant 4.000000e+00 : f32
    %4 = vector.broadcast %cst_2 : f32 to vector<1x256xf32>
    %5 = arith.divf %3, %4 : vector<1x256xf32>
    %6 = vector.broadcast %5 : vector<1x256xf32> to vector<4x256xf32>
    %7 = arith.subf %1, %6 : vector<4x256xf32>
    %8 = arith.mulf %7, %7 : vector<4x256xf32>
    %cst_3 = arith.constant dense<0.000000e+00> : vector<256xf32>
    %9 = vector.multi_reduction <add>, %8, %cst_3 [0] : vector<4x256xf32> to vector<256xf32>
    %10 = vector.shape_cast %9 : vector<256xf32> to vector<1x256xf32>
    %cst_4 = arith.constant 4.000000e+00 : f32
    %11 = vector.broadcast %cst_4 : f32 to vector<1x256xf32>
    %12 = arith.divf %10, %11 : vector<1x256xf32>
    %cst_5 = arith.constant 9.99999974E-6 : f32
    %13 = vector.broadcast %cst_5 : f32 to vector<1x256xf32>
    %14 = arith.addf %12, %13 : vector<1x256xf32>
    %15 = math.rsqrt %14 : vector<1x256xf32>
    %16 = vector.broadcast %15 : vector<1x256xf32> to vector<4x256xf32>
    %17 = arith.mulf %1, %16 : vector<4x256xf32>
    %c0_6 = arith.constant 0 : index
    %c0_7 = arith.constant 0 : index
    %18 = vector.load %arg3[%c0_6, %c0_7] : memref<4x1xf32, #tpu.memory_space<vmem>>, vector<4x1xf32>
    %19 = vector.broadcast %18 : vector<4x1xf32> to vector<4x256xf32>
    %20 = arith.mulf %17, %19 : vector<4x256xf32>
    %c0_8 = arith.constant 0 : index
    %c0_9 = arith.constant 0 : index
    %c0_10 = arith.constant 0 : index
    %21 = vector.load %arg4[%c0_8, %c0_9, %c0_10] : memref<1x4x256xf32, #tpu.memory_space<vmem>>, vector<1x4x256xf32>
    %22 = vector.shape_cast %21 : vector<1x4x256xf32> to vector<4x256xf32>
    %23 = vector.shape_cast %20 : vector<4x256xf32> to vector<1x4x256xf32>
    tpu.vector_store %arg4[%c0_8, %c0_9, %c0_10], %23 {strides = array<i32>} : memref<1x4x256xf32, #tpu.memory_space<vmem>>, vector<1x4x256xf32>,
    return
  }
  func.func @transform_0(%arg0: i32, %arg1: i32) -> (i32, i32, i32) {
    %c0_i32 = arith.constant 0 : i32
    %c0_i32_0 = arith.constant 0 : i32
    return %arg0, %c0_i32, %arg1 : i32, i32, i32
  }
  func.func @transform_1(%arg0: i32, %arg1: i32) -> (i32, i32) {
    %c0_i32 = arith.constant 0 : i32
    %c0_i32_0 = arith.constant 0 : i32
    %c0_i32_1 = arith.constant 0 : i32
    return %c0_i32, %c0_i32_0 : i32, i32
  }
  func.func @transform_2(%arg0: i32, %arg1: i32) -> (i32, i32, i32) {
    %c0_i32 = arith.constant 0 : i32
    %c0_i32_0 = arith.constant 0 : i32
    return %arg0, %c0_i32, %arg1 : i32, i32, i32
  }
}

</mosaic_0001>

<llo_original>
// kernel: bias_free_layernorm_nchw.1
$region0: #{bias_free_layernorm_nchw.1}
  #allocation0 [shape = 'u32[]', space=smem, size = 0x4, offset = 0x4, fixed_abs, tag = 'smem constant byte address 0x4 - core index']
  #allocation1 [shape = 'u32[72,128]{1,0:T(1,128)}', space=vmem, size = 0x9000, scoped, tag = 'internal scratch']
  %s0 = inlined_call_operand.vmem [shape: f32[2,4,256], index: 0, kind: input, shape index: {}]
  %s1 = inlined_call_operand.vmem [shape: f32[4,1], index: 1, kind: input, shape index: {}]
  %s2 = inlined_call_operand.vmem [shape: f32[2,4,256], index: 2, kind: output, shape index: {}]
  %s3 = sld [smem:[#allocation0]]
  $region41: #{bias_free_layernorm_nchw.1} parent=0
    _
  %s5 = ssub.s32 1, %s3
  %s6 = scalar_select 0, %s5, %s3
  loop: start=0, step=1, limit=4
  $region2: #{bias_free_layernorm_nchw.1} parent=0 // loop_pre_header
    _
  $region3: #{bias_free_layernorm_nchw.1} parent=0 // loop_header
    %s8 = sphi 0, %s12
    %p9 = scmp.ge.s32.totalorder %s8, 4
    %s15 = sphi 0, %s27
    %s16 = sphi 0, %s23
    %s17 = sphi 0, %s15
    %s18 = sphi 0, %s16
    %s19 = sphi 0, %s17
    %s20 = sphi 0, %s18
    %s32 = sphi 0, %s34
    %s35 = sphi 0, %s32
    %s36 = sphi 0, %s35
    %s52 = sphi 0, %s36
    %s56 = sphi 0, %s56
    %s58 = sphi 0, %s56
    %s59 = sphi 0, %s58
    %s73 = sphi 0, %s59
    %s81 = sphi 0, %s83
    %s84 = sphi 0, %s81
    %s85 = sphi 0, %s84
    %s101 = sphi 0, %s85
  $region4: #{bias_free_layernorm_nchw.1} parent=0 // loop_header_branch
    %11 = sbr.rel (%p9) target = $region8
  $region5: #{bias_free_layernorm_nchw.1} parent=0 // loop_body
    %s13 = ssub.s32 %s8, 1
    %s14 = ssub.s32 %s8, 2
    %s21 = sadd.s32 1, %s16
    %p22 = scmp.ge.s32.totalorder %s21, 1
    %s23 = scalar_select %p22, 0, %s21
    %s24 = sadd.s32 1, %s15
    %s25 = scalar_select %p22, %s24, %s15
    %p26 = scmp.ge.s32.totalorder %s25, 2
    %s27 = scalar_select %p26, 0, %s25
    %s28 = ssub.s32 %s15, %s27
    %s29 = ssub.s32 %s16, %s23
    %s30 = sor.u32 %s28, %s29
    %p31 = scmp.eq.s32.totalorder %s30, 0
    %s33 = sadd.s32 %s32, 1
    %s34 = scalar_select %p31, %s32, %s33
    %p37 = pneg %p31
    %p38 = scmp.eq.s32.totalorder %s8, 1
    %p39 = por %p37, %p38
    %p40 = scmp.ne.s32.totalorder %s32, %s35
    %p41 = scmp.eq.s32.totalorder %s8, 0
    %p42 = por %p40, %p41
    %p43 = scmp.ne.s32.totalorder %s32, %s35
    %p44 = scmp.eq.s32.totalorder %s13, 1
    %p45 = por %p43, %p44
    %p46 = scmp.ne.s32.totalorder %s35, %s36
    %p47 = scmp.eq.s32.totalorder %s13, 0
    %p48 = por %p46, %p47
    %p49 = scmp.ne.s32.totalorder %s35, %s36
    %p50 = scmp.eq.s32.totalorder %s14, 1
    %p51 = por %p49, %p50
    %p53 = scmp.ne.s32.totalorder %s36, %s52
    %p54 = scmp.eq.s32.totalorder %s14, 0
    %p55 = por %p53, %p54
    %s57 = sadd.s32 %s56, 1
    %p60 = scmp.eq.s32.totalorder %s8, 1
    %p61 = scmp.ne.s32.totalorder %s56, %s58
    %p62 = scmp.eq.s32.totalorder %s8, 0
    %p63 = por %p61, %p62
    %p64 = scmp.ne.s32.totalorder %s56, %s58
    %p65 = scmp.eq.s32.totalorder %s13, 1
    %p66 = por %p64, %p65
    %p67 = scmp.ne.s32.totalorder %s58, %s59
    %p68 = scmp.eq.s32.totalorder %s13, 0
    %p69 = por %p67, %p68
    %p70 = scmp.ne.s32.totalorder %s58, %s59
    %p71 = scmp.eq.s32.totalorder %s14, 1
    %p72 = por %p70, %p71
    %p74 = scmp.ne.s32.totalorder %s59, %s73
    %p75 = scmp.eq.s32.totalorder %s14, 0
    %p76 = por %p74, %p75
    %s77 = ssub.s32 %s15, %s27
    %s78 = ssub.s32 %s16, %s23
    %s79 = sor.u32 %s77, %s78
    %p80 = scmp.eq.s32.totalorder %s79, 0
    %s82 = sadd.s32 %s81, 1
    %s83 = scalar_select %p80, %s81, %s82
    %p86 = pneg %p80
    %p87 = scmp.eq.s32.totalorder %s8, 1
    %p88 = por %p86, %p87
    %p89 = scmp.ne.s32.totalorder %s81, %s84
    %p90 = scmp.eq.s32.totalorder %s8, 0
    %p91 = por %p89, %p90
    %p92 = scmp.ne.s32.totalorder %s81, %s84
    %p93 = scmp.eq.s32.totalorder %s13, 1
    %p94 = por %p92, %p93
    %p95 = scmp.ne.s32.totalorder %s84, %s85
    %p96 = scmp.eq.s32.totalorder %s13, 0
    %p97 = por %p95, %p96
    %p98 = scmp.ne.s32.totalorder %s84, %s85
    %p99 = scmp.eq.s32.totalorder %s14, 1
    %p100 = por %p98, %p99
    %p102 = scmp.ne.s32.totalorder %s85, %s101
    %p103 = scmp.eq.s32.totalorder %s14, 0
    %p104 = por %p102, %p103
    %p105 = scmp.le.s32.totalorder 1, %s8
    %p106 = scmp.lt.s32.totalorder %s8, 3
    %p107 = pnand %p105, %p106
    %p108 = pneg %p107
    // Predicated region
    $region9: #{bias_free_layernorm_nchw.1} parent=5 // pred_check
      _
    $region10: #{bias_free_layernorm_nchw.1} parent=5 // pred_check_branch
      %110 = sbr.rel (%p107) target = $region12
    $region11: #{bias_free_layernorm_nchw.1} parent=5 // pred_region
      %s111 = ssub.s32 %s8, 1
      // Predicated region
      $region13: #{bias_free_layernorm_nchw.1} parent=11 // pred_check
        %p112 = pneg %p69
      $region14: #{bias_free_layernorm_nchw.1} parent=11 // pred_check_branch
        %114 = sbr.rel (%p112) target = $region16
      $region15: #{bias_free_layernorm_nchw.1} parent=11 // pred_region
        _
      $region16: #{bias_free_layernorm_nchw.1} parent=11 // pred_fallthru
        _
    $region12: #{bias_free_layernorm_nchw.1} parent=5 // pred_fallthru
      _
    %p115 = scmp.lt.s32.totalorder %s8, 2
    // Predicated region
    $region17: #{bias_free_layernorm_nchw.1} parent=5 // pred_check
      %p116 = pneg %p115
    $region18: #{bias_free_layernorm_nchw.1} parent=5 // pred_check_branch
      %118 = sbr.rel (%p116) target = $region20
    $region19: #{bias_free_layernorm_nchw.1} parent=5 // pred_region
      // Predicated region
      $region21: #{bias_free_layernorm_nchw.1} parent=19 // pred_check
        %p119 = pneg %p42
      $region22: #{bias_free_layernorm_nchw.1} parent=19 // pred_check_branch
        %121 = sbr.rel (%p119) target = $region24
      $region23: #{bias_free_layernorm_nchw.1} parent=19 // pred_region
        %s122 = smul.u32 2, %s16
        %p123 = scmp.lt.s32.totalorder %s15, 1
        %s124 = scalar_select %p123, %s15, 1
        %p125 = scmp.lt.s32.totalorder %s122, 1
        %s126 = scalar_select %p125, %s122, 1
        %s127 = smul.addr %s124, 2
        %s128 = sadd.s32 %s126, %s127
        %s129 = smul.addr %s128, 4
        %s130 = scalar_lea.vmem %s0, %s129
        %s131 = smul.u32 2, %s16
      $region24: #{bias_free_layernorm_nchw.1} parent=19 // pred_fallthru
        _
    $region20: #{bias_free_layernorm_nchw.1} parent=5 // pred_fallthru
      _
    %p132 = scmp.le.s32.totalorder 1, %s8
    %p133 = scmp.lt.s32.totalorder %s8, 3
    %p134 = pnand %p132, %p133
    %p135 = pneg %p134
    // Predicated region
    $region25: #{bias_free_layernorm_nchw.1} parent=5 // pred_check
      _
    $region26: #{bias_free_layernorm_nchw.1} parent=5 // pred_check_branch
      %137 = sbr.rel (%p134) target = $region28
    $region27: #{bias_free_layernorm_nchw.1} parent=5 // pred_region
      %s138 = ssub.s32 %s8, 1
      %s139 = smul.u32 2, %s18
      %p140 = scmp.lt.s32.totalorder %s17, 1
      %s141 = scalar_select %p140, %s17, 1
      %p142 = scmp.lt.s32.totalorder %s139, 1
      %s143 = scalar_select %p142, %s139, 1
      %s144 = smul.addr %s141, 2
      %s145 = sadd.s32 %s143, %s144
      %s146 = smul.addr %s145, 4
      %s147 = scalar_lea.vmem %s0, %s146
      %p148 = pneg %p48
      %p149 = pneg %p45
      %p150 = pneg %p69
      %p151 = pneg %p66
      %p152 = pneg %p97
      %p153 = pneg %p94
      %s154 = smul.u32 2, %s18
      %p155 = scmp.lt.s32.totalorder %s17, 1
      %s156 = scalar_select %p155, %s17, 1
      %p157 = scmp.lt.s32.totalorder %s154, 1
      %s158 = scalar_select %p157, %s154, 1
      %s159 = smul.addr %s156, 2
      %s160 = sadd.s32 %s158, %s159
      %s161 = smul.addr %s160, 4
      %s162 = scalar_lea.vmem %s2, %s161
      %s163 = smul.u32 2, %s18
      %p164 = scmp.lt.s32.totalorder %s17, 1
      %s165 = scalar_select %p164, %s17, 1
      %p166 = scmp.lt.s32.totalorder %s163, 1
      %s167 = scalar_select %p166, %s163, 1
      %s168 = smul.addr %s165, 2
      %s169 = sadd.s32 %s167, %s168
      %s170 = smul.addr %s169, 4
      %s171 = scalar_lea.vmem %s0, %s170
      %s172 = smul.u32 2, %s18
      %s173 = smul.u32 2, %s18
      %p174 = scmp.lt.s32.totalorder %s17, 1
      %s175 = scalar_select %p174, %s17, 1
      %p176 = scmp.lt.s32.totalorder %s173, 1
      %s177 = scalar_select %p176, %s173, 1
      %s178 = smul.addr %s175, 2
      %s179 = sadd.s32 %s177, %s178
      %s180 = smul.addr %s179, 4
      %s181 = scalar_lea.vmem %s2, %s180
      %s182 = smul.u32 2, %s18
      %v183 = vld [vmem:[%s171] sm:$0xff]
      %185 = vst [vmem:[#allocation1] ss:$2 sm:$0xff] %v183
      %v186 = vld.sshfl [vmem:[#allocation1] sm:$0xff pattern:$0x75316420]
      %v187 = vld.sshfl [vmem:[#allocation1 + $0x8] sm:$0xff pattern:$0x75316420]
      %vm190 = vcmask 1043456
      %v191 = vsel %vm190, %v186, 0.0
      %v192 = vrot.slane %v191, 4
      %v193 = vadd.f32 %v191, %v192
      %v194 = vrot.slane %v193, 2
      %v195 = vadd.f32 %v193, %v194
      %v196 = vrot.slane %v195, 1
      %v197 = vadd.f32 %v195, %v196
      %v198 = vsel %vm190, %v187, 0.0
      %v199 = vrot.slane %v198, 4
      %v200 = vadd.f32 %v198, %v199
      %v201 = vrot.slane %v200, 2
      %v202 = vadd.f32 %v200, %v201
      %v203 = vrot.slane %v202, 1
      %v204 = vadd.f32 %v202, %v203
      %v205 = vrcp.pop 4.0
      %v206 = vmul.f32 4.0, %v205
      %v207 = vsub.f32 1.0, %v206
      %v208 = vmul.f32 %v205, %v207
      %v209 = vadd.f32 %v205, %v208
      %vm210 = vweird.f32 %v205
      %v211 = vsel %vm210, %v205, %v209
      %v212 = vmul.f32 %v197, %v211
      %v213 = vmul.f32 %v204, %v211
      %v216 = vrot.slane %v213, 4
      %v217 = vsel %vm190, %v212, %v216
      %v219 = vsub.f32 %v183, %v217
      %v220 = vmul.f32 %v219, %v219
      %222 = vst [vmem:[#allocation1] ss:$2 sm:$0xff] %v220
      %v223 = vld.sshfl [vmem:[#allocation1] sm:$0xff pattern:$0x75316420]
      %v224 = vld.sshfl [vmem:[#allocation1 + $0x8] sm:$0xff pattern:$0x75316420]
      %v227 = vsel %vm190, %v223, 0.0
      %v228 = vrot.slane %v227, 4
      %v229 = vadd.f32 %v227, %v228
      %v230 = vrot.slane %v229, 2
      %v231 = vadd.f32 %v229, %v230
      %v232 = vrot.slane %v231, 1
      %v233 = vadd.f32 %v231, %v232
      %v234 = vsel %vm190, %v224, 0.0
      %v235 = vrot.slane %v234, 4
      %v236 = vadd.f32 %v234, %v235
      %v237 = vrot.slane %v236, 2
      %v238 = vadd.f32 %v236, %v237
      %v239 = vrot.slane %v238, 1
      %v240 = vadd.f32 %v238, %v239
      %v241 = vmul.f32 %v233, %v211
      %v242 = vmul.f32 %v240, %v211
      %v243 = vadd.f32 %v241, 1e-05
      %v244 = vadd.f32 %v242, 1e-05
      %v245 = vrsqrt.pop %v243
      %v246 = vmul.f32 %v245, %v243
      %v247 = vmul.f32 %v246, %v245
      %v248 = vmul.f32 0.5, %v247
      %v249 = vsub.f32 1.5, %v248
      %v250 = vmul.f32 %v245, %v249
      %vm251 = vweird.f32 %v243
      %vm252 = vweird.f32 %v245
      %vm253 = vmor %vm251, %vm252
      %v254 = vsel %vm253, %v245, %v250
      %v255 = vrsqrt.pop %v244
      %v256 = vmul.f32 %v255, %v244
      %v257 = vmul.f32 %v256, %v255
      %v258 = vmul.f32 0.5, %v257
      %v259 = vsub.f32 1.5, %v258
      %v260 = vmul.f32 %v255, %v259
      %vm261 = vweird.f32 %v244
      %vm262 = vweird.f32 %v255
      %vm263 = vmor %vm261, %vm262
      %v264 = vsel %vm263, %v255, %v260
      %v267 = vrot.slane %v264, 4
      %v268 = vsel %vm190, %v254, %v267
      %v270 = vmul.f32 %v183, %v268
      %v271 = vld [vmem:[%s1] sm:$0xf]
      %273 = vset.pattern.permute.xlu0 0
      %274 = vperm.xlu0 %273, %v271
      %v275 = vpop.permute.xlu0 %274
      %v277 = vunpack.c.l.s4 839922192
      %v278 = vunpack.c.0.s8 %v277
      %v279 = vperm.slane %v275, %v278
      %v281 = vmul.f32 %v270, %v279
      %282 = vst [vmem:[%s181] sm:$0xff] %v281
      %s283 = smul.u32 2, %s18
      %p284 = scmp.lt.s32.totalorder %s17, 1
      %s285 = scalar_select %p284, %s17, 1
      %p286 = scmp.lt.s32.totalorder %s283, 1
      %s287 = scalar_select %p286, %s283, 1
      %s288 = smul.addr %s285, 2
      %s289 = sadd.s32 %s287, %s288
      %s290 = smul.addr %s289, 4
      %s291 = scalar_lea.vmem %s2, %s290
      // Predicated region
      $region29: #{bias_free_layernorm_nchw.1} parent=27 // pred_check
        %p292 = pneg %p94
      $region30: #{bias_free_layernorm_nchw.1} parent=27 // pred_check_branch
        %294 = sbr.rel (%p292) target = $region32
      $region31: #{bias_free_layernorm_nchw.1} parent=27 // pred_region
        %s295 = smul.u32 2, %s18
      $region32: #{bias_free_layernorm_nchw.1} parent=27 // pred_fallthru
        _
    $region28: #{bias_free_layernorm_nchw.1} parent=5 // pred_fallthru
      _
    %p296 = scmp.le.s32.totalorder 2, %s8
    // Predicated region
    $region33: #{bias_free_layernorm_nchw.1} parent=5 // pred_check
      %p297 = pneg %p296
    $region34: #{bias_free_layernorm_nchw.1} parent=5 // pred_check_branch
      %299 = sbr.rel (%p297) target = $region36
    $region35: #{bias_free_layernorm_nchw.1} parent=5 // pred_region
      %s300 = ssub.s32 %s8, 2
      // Predicated region
      $region37: #{bias_free_layernorm_nchw.1} parent=35 // pred_check
        %p301 = pneg %p100
      $region38: #{bias_free_layernorm_nchw.1} parent=35 // pred_check_branch
        %303 = sbr.rel (%p301) target = $region40
      $region39: #{bias_free_layernorm_nchw.1} parent=35 // pred_region
        %s304 = smul.u32 2, %s20
        %p305 = scmp.lt.s32.totalorder %s19, 1
        %s306 = scalar_select %p305, %s19, 1
        %p307 = scmp.lt.s32.totalorder %s304, 1
        %s308 = scalar_select %p307, %s304, 1
        %s309 = smul.addr %s306, 2
        %s310 = sadd.s32 %s308, %s309
        %s311 = smul.addr %s310, 4
        %s312 = scalar_lea.vmem %s2, %s311
      $region40: #{bias_free_layernorm_nchw.1} parent=35 // pred_fallthru
        _
    $region36: #{bias_free_layernorm_nchw.1} parent=5 // pred_fallthru
      _
  $region6: #{bias_free_layernorm_nchw.1} parent=0 // loop_footer
    %s12 = sadd.s32 1, %s8
  $region7: #{bias_free_layernorm_nchw.1} parent=0 // loop_footer_branch
    %7 = sbr.rel target = $region3
  $region8: #{bias_free_layernorm_nchw.1} parent=0 // loop_exit
    _

</llo_original>
